<compile_context>
chip_gen: v5e
topology: v5e:2x2
jax: 0.10.0
libtpu: 0.0.40
codegen_flags: <defaults>
</compile_context>

<pallas_src>
import jax
import jax.numpy as jnp
from jax.experimental import pallas as pl
from jax.experimental.pallas import tpu as pltpu


def _round_up(x, m):
    return ((x + m - 1) // m) * m


def _position_net_kernel(x_ref, w1_ref, b1_ref, w2_ref, b2_ref, o_ref):
    # x_ref : (tm_r, R*D)   lane-dense packed state rows, native dtype (streamed)
    # w1_ref: (R*D, R*H1)   block-diagonal replicated w1^T              (resident)
    # b1_ref: (1,   R*H1)   b1 tiled R times                            (resident)
    # w2_ref: (R*H1, R)     block-diagonal w2 column                    (resident)
    # b2_ref: (1, 1)        second-layer bias, SMEM scalar
    # o_ref : (tm_r, R)     per-row outputs; row-major == (tm_r*R, 1) slice of the batch
    x = x_ref[...].astype(jnp.float32)                                  # in-register upcast
    h = jnp.dot(x, w1_ref[...], preferred_element_type=jnp.float32)    # MXU, K = R*D
    h = jnp.maximum(h + b1_ref[...], 0.0)                               # bias + ReLU (VPU)
    y = jnp.dot(h, w2_ref[...], preferred_element_type=jnp.float32)    # MXU: per-row H1-reduce
    o_ref[...] = y + b2_ref[0, 0]


def position_network_forward(state, w1, b1, w2, b2, *,
                             target_block_bytes=2 << 20,
                             vmem_budget_bytes=24 << 20):
    """Forward pass of PositionNetwork.

    state: (B, D); w1: (H1, D); b1: (H1,); w2: (1, H1); b2: (1,).
    Returns (B, 1) float32, matching the PyTorch module's output layout.
    """
    B, D = state.shape
    H1 = w1.shape[0]
    itemsize = jnp.dtype(state.dtype).itemsize

    # Pack R consecutive state rows into one lane-dense 128-wide row when D divides 128.
    # TODO(synk): for D that does not divide 128 we fall back to R=1 (lane-sparse blocks).
    R = 128 // D if (D <= 128 and 128 % D == 0) else 1
    lane_w = R * D

    x = state
    Bp = _round_up(max(B, 1), R)
    if Bp != B:
        # Rare path: pads by fewer than R (< 128) rows, never to a multiple of the tile.
        x = jnp.pad(x, ((0, Bp - B), (0, 0)))
    Br = Bp // R
    x2d = x.reshape(Br, lane_w)                    # contiguous row-major -> free view/bitcast

    # --- tile sizing (rows of the packed (Br, lane_w) view per grid step) ---
    in_row_b = _round_up(lane_w, 128) * itemsize   # VMEM bytes per packed row (input tile)
    out_row_b = 128 * 4                            # output lane-pads R -> 128 in VMEM (f32)
    per_row_vmem = 2 * (in_row_b + out_row_b) + 3 * 512   # dbl-buffered pipes + f32 temps
    tm_r = max(8, target_block_bytes // max(1, lane_w * itemsize))   # ~2 MiB real input/step
    tm_r = min(tm_r, max(8, vmem_budget_bytes // per_row_vmem))      # VMEM budget cap
    if Br > 16:
        # At least 2 tiles so the "parallel" grid axis can use both v7x TensorCores.
        tm_r = min(tm_r, _round_up(pl.cdiv(Br, 2), 8))
    tm_r = max(8, (tm_r // 8) * 8)
    if tm_r >= Br:
        tm_r = Br                                  # single full-extent block
    n_tiles = pl.cdiv(Br, tm_r)

    # --- tiny resident parameters (a few KiB, rebuilt per call) ---
    f32 = jnp.float32
    eye_r = jnp.eye(R, dtype=f32)
    w1_bd = jnp.kron(eye_r, w1.astype(f32).T)                         # (lane_w, R*H1)
    w2_bd = jnp.kron(eye_r, w2.astype(f32).reshape(H1, 1))            # (R*H1, R)
    b1_rep = jnp.tile(b1.astype(f32).reshape(H1), R).reshape(1, R * H1)
    b2_2d = b2.astype(f32).reshape(1, 1)

    vmem_limit = int(2 * tm_r * (in_row_b + out_row_b) + 3 * tm_r * 512 + (2 << 20))
    vmem_limit = max(vmem_limit, 8 << 20)

    out2d = pl.pallas_call(
        _position_net_kernel,
        out_shape=jax.ShapeDtypeStruct((Br, R), jnp.float32),
        grid=(n_tiles,),
        in_specs=[
            pl.BlockSpec((tm_r, lane_w), lambda i: (i, 0)),        # streamed state (native dtype)
            pl.BlockSpec((lane_w, R * H1), lambda i: (0, 0)),      # resident block-diag w1^T
            pl.BlockSpec((1, R * H1), lambda i: (0, 0)),           # resident tiled b1
            pl.BlockSpec((R * H1, R), lambda i: (0, 0)),           # resident block-diag w2
            pl.BlockSpec(memory_space=pltpu.MemorySpace.SMEM),     # b2 scalar
        ],
        out_specs=pl.BlockSpec((tm_r, R), lambda i: (i, 0)),
        compiler_params=pltpu.CompilerParams(
            dimension_semantics=("parallel",),
            vmem_limit_bytes=vmem_limit,
        ),
        cost_estimate=pl.CostEstimate(
            flops=int(2 * Bp * D * H1 + 2 * Bp * H1),
            transcendentals=0,
            bytes_accessed=int(Bp * D * itemsize + Bp * 4),
        ),
    )(x2d, w1_bd, b1_rep, w2_bd, b2_2d)

    out = out2d.reshape(Bp, 1)
    return out if Bp == B else out[:B]


def init_position_network_params(key, state_dim, h1=3):
    """Deterministic init mirroring nn.Linear's U(-1/sqrt(fan_in), 1/sqrt(fan_in))."""
    k1, k2, k3, k4 = jax.random.split(key, 4)
    lim1 = 1.0 / jnp.sqrt(jnp.float32(state_dim))
    lim2 = 1.0 / jnp.sqrt(jnp.float32(h1))
    w1 = jax.random.uniform(k1, (h1, state_dim), jnp.float32, -lim1, lim1)
    b1 = jax.random.uniform(k2, (h1,), jnp.float32, -lim1, lim1)
    w2 = jax.random.uniform(k3, (1, h1), jnp.float32, -lim2, lim2)
    b2 = jax.random.uniform(k4, (1,), jnp.float32, -lim2, lim2)
    return w1, b1, w2, b2


def _reference(state, w1, b1, w2, b2):
    h = jnp.maximum(
        jnp.dot(state, w1.T, preferred_element_type=jnp.float32) + b1, 0.0)
    return jnp.dot(h, w2.T, preferred_element_type=jnp.float32) + b2


if __name__ == "__main__":
    key = jax.random.PRNGKey(0)
    k_params, k_s1, k_s2, k_s3, k_s4 = jax.random.split(key, 5)

    state_dim, h1 = 16, 3
    w1, b1, w2, b2 = init_position_network_params(k_params, state_dim, h1)
    fwd = jax.jit(position_network_forward)

    # Case 1: tiny batch, B % 8 == 0 -> free packed reshape, single grid tile.
    s1 = jax.random.normal(k_s1, (8, state_dim), jnp.float32)
    o1 = jax.block_until_ready(fwd(s1, w1, b1, w2, b2))
    assert o1.shape == (8, 1)
    assert jnp.allclose(o1, _reference(s1, w1, b1, w2, b2), atol=1e-5, rtol=1e-5)

    # Case 2: B % 8 != 0 -> tiny (<8-row) pad, two parallel grid tiles + ragged tail block.
    s2 = jax.random.normal(k_s2, (300, state_dim), jnp.float32)
    o2 = jax.block_until_ready(fwd(s2, w1, b1, w2, b2))
    assert o2.shape == (300, 1)
    assert jnp.allclose(o2, _reference(s2, w1, b1, w2, b2), atol=1e-5, rtol=1e-5)

    # Case 3: bf16 state streamed in its native dtype, upcast in-register inside the kernel.
    s3 = jax.random.normal(k_s3, (64, state_dim), jnp.float32).astype(jnp.bfloat16)
    o3 = jax.block_until_ready(fwd(s3, w1, b1, w2, b2))
    ref3 = _reference(s3.astype(jnp.float32), w1, b1, w2, b2)
    assert o3.shape == (64, 1)
    assert jnp.allclose(o3, ref3, atol=1e-4, rtol=1e-4)

    # Case 4: state_dim that doesn't divide 128 -> R = 1 fallback path, ragged tail.
    w1b, b1b, w2b, b2b = init_position_network_params(k_params, 10, h1)
    s4 = jax.random.normal(k_s4, (50, 10), jnp.float32)
    o4 = jax.block_until_ready(fwd(s4, w1b, b1b, w2b, b2b))
    assert o4.shape == (50, 1)
    assert jnp.allclose(o4, _reference(s4, w1b, b1b, w2b, b2b), atol=1e-5, rtol=1e-5)

    print("KERNEL_OK")
</pallas_src>

<mosaic_0001>
module attributes {stable_mosaic.version = 11 : i64} {
  func.func @_position_net_kernel(%arg0: i32, %arg1: memref<1x128xf32, #tpu.memory_space<vmem>>, %arg2: memref<128x24xf32, #tpu.memory_space<vmem>>, %arg3: memref<1x24xf32, #tpu.memory_space<vmem>>, %arg4: memref<24x8xf32, #tpu.memory_space<vmem>>, %arg5: memref<1x1xf32, #tpu.memory_space<smem>>, %arg6: memref<1x8xf32, #tpu.memory_space<vmem>>) attributes {dimension_semantics = [#tpu.dimension_semantics<parallel>], iteration_bounds = array<i64: 1>, scalar_prefetch = 0 : i64, scratch_operands = 0 : i64, tpu.core_type = #tpu.core_type<tc>, window_params = [{transform_indices = @transform_0, window_bounds = array<i64: 1, 128>}, {pipeline_mode = #tpu.pipeline_mode<synchronous>, transform_indices = @transform_1, window_bounds = array<i64: 128, 24>}, {pipeline_mode = #tpu.pipeline_mode<synchronous>, transform_indices = @transform_2, window_bounds = array<i64: 1, 24>}, {pipeline_mode = #tpu.pipeline_mode<synchronous>, transform_indices = @transform_3, window_bounds = array<i64: 24, 8>}, {transform_indices = @transform_4, window_bounds = array<i64: 1, 1>}, {transform_indices = @transform_5, window_bounds = array<i64: 1, 8>}]} {
    %c0 = arith.constant 0 : index
    %c0_0 = arith.constant 0 : index
    %0 = vector.load %arg1[%c0, %c0_0] : memref<1x128xf32, #tpu.memory_space<vmem>>, vector<1x128xf32>
    %c0_1 = arith.constant 0 : index
    %c0_2 = arith.constant 0 : index
    %1 = vector.load %arg2[%c0_1, %c0_2] : memref<128x24xf32, #tpu.memory_space<vmem>>, vector<128x24xf32>
    %cst = arith.constant dense<0.000000e+00> : vector<1x24xf32>
    %2 = tpu.matmul %0, %1, %cst {dimension_numbers = #tpu.dot_dimension_numbers<[1], [0], [0], [1], [0, 0, 1, 1], [], []>} : vector<1x128xf32>, vector<128x24xf32>, vector<1x24xf32> -> vector<1x24xf32>
    %c0_3 = arith.constant 0 : index
    %c0_4 = arith.constant 0 : index
    %3 = vector.load %arg3[%c0_3, %c0_4] : memref<1x24xf32, #tpu.memory_space<vmem>>, vector<1x24xf32>
    %4 = arith.addf %2, %3 : vector<1x24xf32>
    %cst_5 = arith.constant 0.000000e+00 : f32
    %5 = vector.broadcast %cst_5 : f32 to vector<1x24xf32>
    %6 = arith.maximumf %4, %5 : vector<1x24xf32>
    %c0_6 = arith.constant 0 : index
    %c0_7 = arith.constant 0 : index
    %7 = vector.load %arg4[%c0_6, %c0_7] : memref<24x8xf32, #tpu.memory_space<vmem>>, vector<24x8xf32>
    %cst_8 = arith.constant dense<0.000000e+00> : vector<1x8xf32>
    %8 = tpu.matmul %6, %7, %cst_8 {dimension_numbers = #tpu.dot_dimension_numbers<[1], [0], [0], [1], [0, 0, 1, 1], [], []>} : vector<1x24xf32>, vector<24x8xf32>, vector<1x8xf32> -> vector<1x8xf32>
    %c0_9 = arith.constant 0 : index
    %c0_10 = arith.constant 0 : index
    %9 = memref.load %arg5[%c0_9, %c0_10] : memref<1x1xf32, #tpu.memory_space<smem>>
    %10 = vector.broadcast %9 : f32 to vector<1x8xf32>
    %11 = arith.addf %8, %10 : vector<1x8xf32>
    %c0_11 = arith.constant 0 : index
    %c0_12 = arith.constant 0 : index
    %12 = vector.load %arg6[%c0_11, %c0_12] : memref<1x8xf32, #tpu.memory_space<vmem>>, vector<1x8xf32>
    tpu.vector_store %arg6[%c0_11, %c0_12], %11 {strides = array<i32>} : memref<1x8xf32, #tpu.memory_space<vmem>>, vector<1x8xf32>,
    return
  }
  func.func @transform_0(%arg0: i32) -> (i32, i32) {
    %c0_i32 = arith.constant 0 : i32
    %c0_i32_0 = arith.constant 0 : i32
    return %arg0, %c0_i32 : i32, i32
  }
  func.func @transform_1(%arg0: i32) -> (i32, i32) {
    %c0_i32 = arith.constant 0 : i32
    %c0_i32_0 = arith.constant 0 : i32
    %c0_i32_1 = arith.constant 0 : i32
    return %c0_i32, %c0_i32_0 : i32, i32
  }
  func.func @transform_2(%arg0: i32) -> (i32, i32) {
    %c0_i32 = arith.constant 0 : i32
    %c0_i32_0 = arith.constant 0 : i32
    %c0_i32_1 = arith.constant 0 : i32
    return %c0_i32, %c0_i32_0 : i32, i32
  }
  func.func @transform_3(%arg0: i32) -> (i32, i32) {
    %c0_i32 = arith.constant 0 : i32
    %c0_i32_0 = arith.constant 0 : i32
    %c0_i32_1 = arith.constant 0 : i32
    return %c0_i32, %c0_i32_0 : i32, i32
  }
  func.func @transform_4(%arg0: i32) -> (i32, i32) {
    %c0_i32 = arith.constant 0 : i32
    %c0_i32_0 = arith.constant 0 : i32
    %c0_i32_1 = arith.constant 0 : i32
    return %c0_i32, %c0_i32_0 : i32, i32
  }
  func.func @transform_5(%arg0: i32) -> (i32, i32) {
    %c0_i32 = arith.constant 0 : i32
    %c0_i32_0 = arith.constant 0 : i32
    return %arg0, %c0_i32 : i32, i32
  }
}

</mosaic_0001>

<llo_original>
// kernel: tile.9
$region0: #{tile.9}
  %s0 = inlined_call_operand.vmem [shape: f32[8,3], index: 0, kind: input, shape index: {}]
  %s1 = inlined_call_operand.vmem [shape: f32[1,24], index: 1, kind: output, shape index: {}]
  $region1: #{tile.9} parent=0
    #allocation0 [shape = 'u8[4096]{0}', space=vmem, size = 0x1000, scoped, tag = 'scoped mem for output reshape']
    %v2 = vld [vmem:[%s0] sm:$0x1]
    %vm3 = vcmask 23552
    %4 = vst.msk [vmem:[#allocation0] sm:$0x1] %vm3, %v2
    %s5 = scalar_lea.vmem %s0, 7
    %v6 = vld [vmem:[%s5] sm:$0x1]
    %7 = vrot.lane.b32.xlu0 %v6, 21
    %v8 = vpop.permute.xlu0 %7
    %vm9 = vcmask 195752
    %10 = vst.msk [vmem:[#allocation0] sm:$0x1] %vm9, %v8
    %s11 = scalar_lea.vmem %s0, 6
    %v12 = vld [vmem:[%s11] sm:$0x1]
    %13 = vrot.lane.b32.xlu0 %v12, 18
    %v14 = vpop.permute.xlu0 %13
    %vm15 = vcmask 171152
    %16 = vst.msk [vmem:[#allocation0] sm:$0x1] %vm15, %v14
    %s17 = scalar_lea.vmem %s0, 5
    %v18 = vld [vmem:[%s17] sm:$0x1]
    %19 = vrot.lane.b32.xlu0 %v18, 15
    %v20 = vpop.permute.xlu0 %19
    %vm21 = vcmask 146552
    %22 = vst.msk [vmem:[#allocation0] sm:$0x1] %vm21, %v20
    %s23 = scalar_lea.vmem %s0, 4
    %v24 = vld [vmem:[%s23] sm:$0x1]
    %25 = vrot.lane.b32.xlu0 %v24, 12
    %v26 = vpop.permute.xlu0 %25
    %vm27 = vcmask 121952
    %28 = vst.msk [vmem:[#allocation0] sm:$0x1] %vm27, %v26
    %s29 = scalar_lea.vmem %s0, 3
    %v30 = vld [vmem:[%s29] sm:$0x1]
    %31 = vrot.lane.b32.xlu0 %v30, 9
    %v32 = vpop.permute.xlu0 %31
    %vm33 = vcmask 97352
    %34 = vst.msk [vmem:[#allocation0] sm:$0x1] %vm33, %v32
    %s35 = scalar_lea.vmem %s0, 2
    %v36 = vld [vmem:[%s35] sm:$0x1]
    %37 = vrot.lane.b32.xlu0 %v36, 6
    %v38 = vpop.permute.xlu0 %37
    %vm39 = vcmask 72752
    %40 = vst.msk [vmem:[#allocation0] sm:$0x1] %vm39, %v38
    %s41 = scalar_lea.vmem %s0, 1
    %v42 = vld [vmem:[%s41] sm:$0x1]
    %43 = vrot.lane.b32.xlu0 %v42, 3
    %v44 = vpop.permute.xlu0 %43
    %vm45 = vcmask 48152
    %46 = vst.msk [vmem:[#allocation0] sm:$0x1] %vm45, %v44
    %s48 = ssub.s32 2, 1
    %v49 = vld [vmem:[#allocation0] sm:%s48]
    %s51 = ssub.s32 2, 1
    %52 = vst [vmem:[%s1] sm:%s51] %v49

// kernel: position_network_forward.1
$region0: #{position_network_forward.1}
  #allocation0 [shape = 'u32[]', space=smem, size = 0x4, offset = 0x4, fixed_abs, tag = 'smem constant byte address 0x4 - core index']
  #allocation1 [shape = 'u32[72,128]{1,0:T(1,128)}', space=vmem, size = 0x9000, scoped, tag = 'internal scratch']
  #allocation2 [shape = 'f32[1,1]{1,0:T(1,128)S(6)}', space=smem, size = 0x200, scoped, tag = 'scoped memory for position_network_forward.1']
  %s0 = inlined_call_operand.vmem [shape: f32[1,128], index: 0, kind: input, shape index: {}]
  %s1 = inlined_call_operand.vmem [shape: f32[128,24], index: 1, kind: input, shape index: {}]
  %s2 = inlined_call_operand.vmem [shape: f32[1,24], index: 2, kind: input, shape index: {}]
  %s3 = inlined_call_operand.vmem [shape: f32[24,8], index: 3, kind: input, shape index: {}]
  %s4 = inlined_call_operand.<no memory space> [shape: f32[1,1], index: 4, kind: input, shape index: {}]
  %s5 = inlined_call_operand.hbm [shape: f32[1,8], index: 5, kind: output, shape index: {}]
  %s6 = sld [smem:[#allocation0]]
  $region30: #{position_network_forward.1} parent=0
    _
  %s8 = ssub.s32 1, %s6
  %s9 = scalar_select 0, %s8, %s6
  %10 = sst [smem:[#allocation2]] %s4
  $region1: #{position_network_forward.1} parent=0
    #allocation3 [shape = 'u8[512]{0}', space=vmem, size = 0x400, scoped, tag = 'output window, operand 0, single buffered']
    #allocation4 [shape = 's32[1]{0}', space=sflag, size = 0x4, scoped, tag = 'scoped memory for position_network_forward.1']
    %11 = vsyncpa [#allocation4], 0
    // Predicated region
    $region2: #{position_network_forward.1} parent=1 // pred_check
      _
    $region3: #{position_network_forward.1} parent=1 // pred_check_branch
      %13 = sbr.rel (0) target = $region5
    $region4: #{position_network_forward.1} parent=1 // pred_region
      _
    $region5: #{position_network_forward.1} parent=1 // pred_fallthru
      _
    // Predicated region
    $region6: #{position_network_forward.1} parent=1 // pred_check
      _
    $region7: #{position_network_forward.1} parent=1 // pred_check_branch
      %15 = sbr.rel (0) target = $region9
    $region8: #{position_network_forward.1} parent=1 // pred_region
      _
    $region9: #{position_network_forward.1} parent=1 // pred_fallthru
      _
    // Predicated region
    $region10: #{position_network_forward.1} parent=1 // pred_check
      _
    $region11: #{position_network_forward.1} parent=1 // pred_check_branch
      %17 = sbr.rel (0) target = $region13
    $region12: #{position_network_forward.1} parent=1 // pred_region
      _
    $region13: #{position_network_forward.1} parent=1 // pred_fallthru
      _
    // Predicated region
    $region14: #{position_network_forward.1} parent=1 // pred_check
      _
    $region15: #{position_network_forward.1} parent=1 // pred_check_branch
      %19 = sbr.rel (0) target = $region17
    $region16: #{position_network_forward.1} parent=1 // pred_region
      _
    $region17: #{position_network_forward.1} parent=1 // pred_fallthru
      _
    // Predicated region
    $region18: #{position_network_forward.1} parent=1 // pred_check
      _
    $region19: #{position_network_forward.1} parent=1 // pred_check_branch
      %21 = sbr.rel (0) target = $region21
    $region20: #{position_network_forward.1} parent=1 // pred_region
      _
    $region21: #{position_network_forward.1} parent=1 // pred_fallthru
      _
    %v22 = vld [vmem:[%s0] sm:$0x1]
    %v23 = vld [vmem:[%s1] sm:$0xff]
    %v24 = vld [vmem:[%s1 + $0x8] sm:$0xff]
    %v25 = vld [vmem:[%s1 + $0x10] sm:$0xff]
    %v26 = vld [vmem:[%s1 + $0x18] sm:$0xff]
    %v27 = vld [vmem:[%s1 + $0x20] sm:$0xff]
    %v28 = vld [vmem:[%s1 + $0x28] sm:$0xff]
    %v29 = vld [vmem:[%s1 + $0x30] sm:$0xff]
    %v30 = vld [vmem:[%s1 + $0x38] sm:$0xff]
    %v31 = vld [vmem:[%s1 + $0x40] sm:$0xff]
    %v32 = vld [vmem:[%s1 + $0x48] sm:$0xff]
    %v33 = vld [vmem:[%s1 + $0x50] sm:$0xff]
    %v34 = vld [vmem:[%s1 + $0x58] sm:$0xff]
    %v35 = vld [vmem:[%s1 + $0x60] sm:$0xff]
    %v36 = vld [vmem:[%s1 + $0x68] sm:$0xff]
    %v37 = vld [vmem:[%s1 + $0x70] sm:$0xff]
    %v38 = vld [vmem:[%s1 + $0x78] sm:$0xff]
    %v39 = vld [vmem:[%s2] sm:$0x1]
    %40 = vmatpush.msra.mxu0 %v38
    %41 = vmatpush.msra.mxu0 %v37
    %42 = vmatpush.msra.mxu0 %v36
    %43 = vmatpush.msra.mxu0 %v35
    %44 = vmatpush.msra.mxu0 %v34
    %45 = vmatpush.msra.mxu0 %v33
    %46 = vmatpush.msra.mxu0 %v32
    %47 = vmatpush.msra.mxu0 %v31
    %48 = vmatpush.msra.mxu0 %v30
    %49 = vmatpush.msra.mxu0 %v29
    %50 = vmatpush.msra.mxu0 %v28
    %51 = vmatpush.msra.mxu0 %v27
    %52 = vmatpush.msra.mxu0 %v26
    %53 = vmatpush.msra.mxu0 %v25
    %54 = vmatpush.msra.mxu0 %v24
    %55 = vmatpush.msra.mxu0 %v23
    %56 = vmatmul.f32.gmra.mxu0 %v22
    %v57 = vpop.f32.mrf.mxu0
    %v58 = vadd.f32 %v39, %v57
    %59 = vdwg.mxu0
    %v60 = vmax.f32 %v58, 0.0
    %v61 = vld [vmem:[%s3] sm:$0xff]
    %v62 = vld [vmem:[%s3 + $0x8] sm:$0xff]
    %v63 = vld [vmem:[%s3 + $0x10] sm:$0xff]
    %s64 = sld [smem:[#allocation2]]
    %v65 = vstv %s64
    %vm66 = vcmask 195584
    %v68 = vsel %vm66, %v60, 0
    %70 = vmatpush.msra.mxu0 0.0
    %71 = vmatpush.msra.mxu0 0.0
    %72 = vmatpush.msra.mxu0 0.0
    %73 = vmatpush.msra.mxu0 0.0
    %74 = vmatpush.msra.mxu0 0.0
    %75 = vmatpush.msra.mxu0 0.0
    %76 = vmatpush.msra.mxu0 0.0
    %77 = vmatpush.msra.mxu0 0.0
    %78 = vmatpush.msra.mxu0 0.0
    %79 = vmatpush.msra.mxu0 0.0
    %80 = vmatpush.msra.mxu0 0.0
    %81 = vmatpush.msra.mxu0 0.0
    %82 = vmatpush.msra.mxu0 0.0
    %83 = vmatpush.msra.mxu0 %v63
    %84 = vmatpush.msra.mxu0 %v62
    %85 = vmatpush.msra.mxu0 %v61
    %86 = vmatmul.f32.gmra.mxu0 %v68
    %v87 = vpop.f32.mrf.mxu0
    %v88 = vadd.f32 %v65, %v87
    %89 = vdwg.mxu0
    %vm90 = vcmask 57344
    %91 = vst.msk [vmem:[#allocation3] sm:$0x1] %vm90, %v88
    // Predicated region
    $region22: #{position_network_forward.1} parent=1 // pred_check
      _
    $region23: #{position_network_forward.1} parent=1 // pred_check_branch
      %93 = sbr.rel (0) target = $region25
    $region24: #{position_network_forward.1} parent=1 // pred_region
      %95 = vsyncadd [#allocation4], 0
      %s97 = sshll.u32 [#allocation3], 4
      %s98 = int_to_ptr.vmem [resolvable:$true] %s97
      %s99 = sshll.u32 %s5, 4
      %s100 = int_to_ptr.hbm [resolvable:$true] %s99
      %102 = dma.vmem_to_hbm [thread:$0]  %s98, 16, %s100, [#allocation4]
    $region25: #{position_network_forward.1} parent=1 // pred_fallthru
      _
    // Predicated region
    $region26: #{position_network_forward.1} parent=1 // pred_check
      _
    $region27: #{position_network_forward.1} parent=1 // pred_check_branch
      %104 = sbr.rel (0) target = $region29
    $region28: #{position_network_forward.1} parent=1 // pred_region
      %106 = dma.done [#allocation4], 16
    $region29: #{position_network_forward.1} parent=1 // pred_fallthru
      _
    %107 = vsyncpa [#allocation4], 1

</llo_original>
